<compile_context>
chip_gen: v7x
topology: tpu7x:2x2x1
jax: 0.10.0
libtpu: 0.0.40
codegen_flags: <defaults>
</compile_context>

<pallas_src>
import functools
import math

import jax
import jax.numpy as jnp
from jax.experimental import pallas as pl
from jax.experimental.pallas import tpu as pltpu

_LANE = 128              # lane-dense last dim (one full vreg width)
_MAX_BLOCK_ROWS = 2048   # 2048x128 f32 block = 1 MiB/stream; ~16.5 MiB double-buffered
_MIN_ROWS_TO_SPLIT = 128   # below this a single full-array block is cheapest
_TARGET_GRID_STEPS = 8     # >= 8 steps: DMA/compute overlap + both v7x cores busy
_VMEM_LIMIT_BYTES = 40 * 1024 * 1024   # conservative for v7x's 64 MiB physical VMEM


def _pick_tiling(rows: int):
    """Pick (tile_rows, grid_steps) for a (rows, 128) layout."""
    if rows < _MIN_ROWS_TO_SPLIT:
        return rows, 1                       # single full-array block
    tile = (rows // _TARGET_GRID_STEPS // 32) * 32   # keep bool blocks on (32,128) tiles
    tile = max(32, min(tile, _MAX_BLOCK_ROWS))
    grid = -(-rows // tile)                  # ragged last block handled by Pallas
    return tile, grid


def _fire_increase_kernel(
    fires_ref, intensity_ref, fuel_ref, attack_ref, rand_ref,   # inputs
    fires_out, intensity_out, fuel_out, burned_out,             # outputs
    *,
    almost_burnout_state: int,
    burnout_state: int,
    increase_prob: float,
    burnout_prob: float,
):
    fires = fires_ref[...]          # int32 (tile_rows, 128)
    intensity = intensity_ref[...]  # int32
    attack = attack_ref[...]        # float32
    rand = rand_ref[...]            # float32

    # lit_tiles & suppressant_needs_unmet
    lit = jnp.logical_and(fires > 0, intensity > 0)
    # required_suppressants = where(fires >= 0, fires, 0); compare vs attack
    required = jnp.maximum(fires, 0).astype(jnp.float32)
    unmet = jnp.logical_and(required > attack, lit)
    almost = jnp.logical_and(unmet, intensity == jnp.int32(almost_burnout_state))

    # increase_probabilities (constants already clipped to [0,1] at trace time)
    probs = jnp.where(
        unmet,
        jnp.where(almost, jnp.float32(burnout_prob), jnp.float32(increase_prob)),
        jnp.float32(0.0),
    )
    fire_increase_mask = rand < probs

    new_intensity = jnp.where(fire_increase_mask, intensity + 1, intensity)
    just_burned = jnp.logical_and(fire_increase_mask,
                                  new_intensity >= jnp.int32(burnout_state))

    fires_out[...] = jnp.where(just_burned, -fires, fires)
    intensity_out[...] = new_intensity
    fuel_out[...] = jnp.where(just_burned, jnp.int32(0), fuel_ref[...])
    burned_out[...] = just_burned            # bool stored directly (no astype pass)


def fire_increase_transition(
    fires, intensity, fuel, attack_counts, randomness_source,
    *,
    fire_states: int,
    stochastic_increase: bool,
    intensity_increase_probability: float,
    stochastic_burnouts: bool,
    burnout_probability: float,
):
    """Returns (new_fires, new_intensity, new_fuel, just_burned_out_mask)."""
    orig_shape = fires.shape
    n = math.prod(orig_shape)

    # Lane-dense tiling: rows of 128 lanes.  Lane-aligned totals take the
    # zero-copy path; others pad the flat array by < 128 elements (copy).
    if n % _LANE == 0:
        n_pad = n
    else:
        n_pad = -(-n // _LANE) * _LANE
    rows = n_pad // _LANE
    tile_rows, grid_rows = _pick_tiling(rows)

    def _prep(x, dtype):
        x = jnp.asarray(x, dtype).reshape(-1)
        if n_pad != n:
            x = jnp.pad(x, (0, n_pad - n))
        return x.reshape(rows, _LANE)

    fires2 = _prep(fires, jnp.int32)
    intensity2 = _prep(intensity, jnp.int32)
    fuel2 = _prep(fuel, jnp.int32)
    attack2 = _prep(attack_counts, jnp.float32)
    rand2 = _prep(randomness_source, jnp.float32)

    # Clip the compile-time probabilities once (matches torch.clamp(probs,0,1)).
    inc = intensity_increase_probability if stochastic_increase else 1.0
    burn = (burnout_probability if stochastic_burnouts
            else intensity_increase_probability)
    inc = float(min(max(inc, 0.0), 1.0))
    burn = float(min(max(burn, 0.0), 1.0))

    kernel = functools.partial(
        _fire_increase_kernel,
        almost_burnout_state=fire_states - 2,
        burnout_state=fire_states - 1,
        increase_prob=inc,
        burnout_prob=burn,
    )

    blk = pl.BlockSpec((tile_rows, _LANE), lambda i: (i, 0))

    out_shapes = (
        jax.ShapeDtypeStruct((rows, _LANE), jnp.int32),   # fires
        jax.ShapeDtypeStruct((rows, _LANE), jnp.int32),   # intensity
        jax.ShapeDtypeStruct((rows, _LANE), jnp.int32),   # fuel
        jax.ShapeDtypeStruct((rows, _LANE), jnp.bool_),   # just_burned_out
    )

    # ~33 B/elem HBM traffic (5 x 4 B in, 3 x 4 B + 1 B out), ~10 flops/elem.
    cost = pl.CostEstimate(flops=10 * n_pad, transcendentals=0,
                           bytes_accessed=33 * n_pad)

    new_fires, new_intensity, new_fuel, burned = pl.pallas_call(
        kernel,
        out_shape=out_shapes,
        grid=(grid_rows,),
        in_specs=[blk] * 5,
        out_specs=(blk, blk, blk, blk),
        compiler_params=pltpu.CompilerParams(
            dimension_semantics=("parallel",),
            vmem_limit_bytes=_VMEM_LIMIT_BYTES),
        cost_estimate=cost,
    )(fires2, intensity2, fuel2, attack2, rand2)

    def _unprep(x):
        x = x.reshape(-1)
        if n_pad != n:
            x = x[:n]
        return x.reshape(orig_shape)

    return (_unprep(new_fires), _unprep(new_intensity), _unprep(new_fuel),
            _unprep(burned))


def _reference(fires, intensity, fuel, attack_counts, randomness_source, *,
               fire_states, stochastic_increase, intensity_increase_probability,
               stochastic_burnouts, burnout_probability):
    """Pure-jnp reference mirroring the PyTorch forward."""
    almost_state = fire_states - 2
    burnout_state = fire_states - 1
    required = jnp.where(fires >= 0, fires, 0).astype(jnp.float32)
    diff = required - attack_counts
    lit = (fires > 0) & (intensity > 0)
    unmet = (diff > 0) & lit
    almost = unmet & (intensity == almost_state)
    increasing = unmet & ~almost
    inc_val = intensity_increase_probability if stochastic_increase else 1.0
    burn_val = (burnout_probability if stochastic_burnouts
                else intensity_increase_probability)
    probs = jnp.zeros_like(randomness_source)
    probs = jnp.where(increasing, inc_val, probs)
    probs = jnp.where(almost, burn_val, probs)
    probs = jnp.clip(probs, 0.0, 1.0)
    mask = randomness_source < probs
    new_int = jnp.where(mask, intensity + 1, intensity)
    burned = mask & (new_int >= burnout_state)
    new_fires = jnp.where(burned, -fires, fires)
    new_fuel = jnp.where(burned, 0, fuel)
    return new_fires, new_int, new_fuel, burned


def _run_case(key, shape, fire_states, params):
    k1, k2, k3, k4, k5 = jax.random.split(key, 5)
    fires = jax.random.randint(k1, shape, -2, 4, dtype=jnp.int32)
    intensity = jax.random.randint(k2, shape, 0, fire_states, dtype=jnp.int32)
    fuel = jax.random.randint(k3, shape, 0, 10, dtype=jnp.int32)
    attack = jax.random.uniform(k4, shape, jnp.float32, 0.0, 2.0)
    rand = jax.random.uniform(k5, shape, jnp.float32)

    # Reference first (kernel must not be able to clobber the inputs we check).
    refs = _reference(fires, intensity, fuel, attack, rand, **params)

    fn = jax.jit(functools.partial(fire_increase_transition, **params))
    outs = jax.block_until_ready(fn(fires, intensity, fuel, attack, rand))

    for o, r in zip(outs, refs):
        assert o.shape == r.shape, (o.shape, r.shape)
        assert o.dtype == r.dtype, (o.dtype, r.dtype)
        assert bool(jnp.all(o == r)), "mismatch vs reference"


if __name__ == "__main__":
    fire_states = 5   # states 0..4; almost_burnout=3, burnout=4
    params = dict(
        fire_states=fire_states,
        stochastic_increase=True,
        intensity_increase_probability=0.7,
        stochastic_burnouts=True,
        burnout_probability=0.3,
    )

    key = jax.random.PRNGKey(0)
    k_small, k_ragged, k_big = jax.random.split(key, 3)

    # Small case from the module spec (single full-array block, grid=(1,)).
    _run_case(k_small, (2, 16, 16), fire_states, params)
    # Medium case whose row count (200) does not divide the tile (32):
    # exercises the cdiv grid with a ragged, clipped last block (no padding).
    _run_case(k_ragged, (5, 40, 128), fire_states, params)
    # Larger lane-aligned case: multi-block (grid=8), zero-copy reshape path.
    _run_case(k_big, (8, 256, 128), fire_states, params)

    print("KERNEL_OK")
</pallas_src>

<mosaic_0001>
module attributes {stable_mosaic.version = 11 : i64} {
  func.func @_fire_increase_kernel(%arg0: i32, %arg1: memref<4x128xi32, #tpu.memory_space<vmem>>, %arg2: memref<4x128xi32, #tpu.memory_space<vmem>>, %arg3: memref<4x128xi32, #tpu.memory_space<vmem>>, %arg4: memref<4x128xf32, #tpu.memory_space<vmem>>, %arg5: memref<4x128xf32, #tpu.memory_space<vmem>>, %arg6: memref<4x128xi32, #tpu.memory_space<vmem>>, %arg7: memref<4x128xi32, #tpu.memory_space<vmem>>, %arg8: memref<4x128xi32, #tpu.memory_space<vmem>>, %arg9: memref<4x128xi32, #tpu.memory_space<vmem>>) attributes {dimension_semantics = [#tpu.dimension_semantics<parallel>], iteration_bounds = array<i64: 1>, scalar_prefetch = 0 : i64, scratch_operands = 0 : i64, tpu.core_type = #tpu.core_type<tc>, window_params = [{transform_indices = @transform_0, window_bounds = array<i64: 4, 128>}, {transform_indices = @transform_1, window_bounds = array<i64: 4, 128>}, {transform_indices = @transform_2, window_bounds = array<i64: 4, 128>}, {transform_indices = @transform_3, window_bounds = array<i64: 4, 128>}, {transform_indices = @transform_4, window_bounds = array<i64: 4, 128>}, {transform_indices = @transform_5, window_bounds = array<i64: 4, 128>}, {transform_indices = @transform_6, window_bounds = array<i64: 4, 128>}, {transform_indices = @transform_7, window_bounds = array<i64: 4, 128>}, {transform_indices = @transform_8, window_bounds = array<i64: 4, 128>}]} {
    %c0 = arith.constant 0 : index
    %c0_0 = arith.constant 0 : index
    %0 = vector.load %arg1[%c0, %c0_0] : memref<4x128xi32, #tpu.memory_space<vmem>>, vector<4x128xi32>
    %c0_1 = arith.constant 0 : index
    %c0_2 = arith.constant 0 : index
    %1 = vector.load %arg2[%c0_1, %c0_2] : memref<4x128xi32, #tpu.memory_space<vmem>>, vector<4x128xi32>
    %c0_3 = arith.constant 0 : index
    %c0_4 = arith.constant 0 : index
    %2 = vector.load %arg4[%c0_3, %c0_4] : memref<4x128xf32, #tpu.memory_space<vmem>>, vector<4x128xf32>
    %c0_5 = arith.constant 0 : index
    %c0_6 = arith.constant 0 : index
    %3 = vector.load %arg5[%c0_5, %c0_6] : memref<4x128xf32, #tpu.memory_space<vmem>>, vector<4x128xf32>
    %c0_i32 = arith.constant 0 : i32
    %4 = vector.broadcast %c0_i32 : i32 to vector<4x128xi32>
    %5 = arith.cmpi sgt, %0, %4 : vector<4x128xi32>
    %c0_i32_7 = arith.constant 0 : i32
    %6 = vector.broadcast %c0_i32_7 : i32 to vector<4x128xi32>
    %7 = arith.cmpi sgt, %1, %6 : vector<4x128xi32>
    %8 = arith.andi %5, %7 : vector<4x128xi1>
    %c0_i32_8 = arith.constant 0 : i32
    %9 = vector.broadcast %c0_i32_8 : i32 to vector<4x128xi32>
    %10 = arith.maxsi %0, %9 : vector<4x128xi32>
    %11 = arith.sitofp %10 : vector<4x128xi32> to vector<4x128xf32>
    %12 = arith.cmpf ogt, %11, %2 : vector<4x128xf32>
    %13 = arith.andi %12, %8 : vector<4x128xi1>
    %c3_i32 = arith.constant 3 : i32
    %14 = vector.broadcast %c3_i32 : i32 to vector<4x128xi32>
    %15 = arith.cmpi eq, %1, %14 : vector<4x128xi32>
    %16 = arith.andi %13, %15 : vector<4x128xi1>
    %cst = arith.constant 3.000000e-01 : f32
    %cst_9 = arith.constant 0.699999988 : f32
    %17 = vector.broadcast %cst : f32 to vector<4x128xf32>
    %18 = vector.broadcast %cst_9 : f32 to vector<4x128xf32>
    %19 = arith.select %16, %17, %18 : vector<4x128xi1>, vector<4x128xf32>
    %cst_10 = arith.constant 0.000000e+00 : f32
    %20 = vector.broadcast %cst_10 : f32 to vector<4x128xf32>
    %21 = arith.select %13, %19, %20 : vector<4x128xi1>, vector<4x128xf32>
    %22 = arith.cmpf olt, %3, %21 : vector<4x128xf32>
    %c1_i32 = arith.constant 1 : i32
    %23 = vector.broadcast %c1_i32 : i32 to vector<4x128xi32>
    %24 = arith.addi %1, %23 : vector<4x128xi32>
    %25 = arith.select %22, %24, %1 : vector<4x128xi1>, vector<4x128xi32>
    %c4_i32 = arith.constant 4 : i32
    %26 = vector.broadcast %c4_i32 : i32 to vector<4x128xi32>
    %27 = arith.cmpi sge, %25, %26 : vector<4x128xi32>
    %28 = arith.andi %22, %27 : vector<4x128xi1>
    %c0_i32_11 = arith.constant 0 : i32
    %29 = vector.broadcast %c0_i32_11 : i32 to vector<4x128xi32>
    %30 = arith.subi %29, %0 : vector<4x128xi32>
    %31 = arith.select %28, %30, %0 : vector<4x128xi1>, vector<4x128xi32>
    %c0_12 = arith.constant 0 : index
    %c0_13 = arith.constant 0 : index
    %32 = vector.load %arg6[%c0_12, %c0_13] : memref<4x128xi32, #tpu.memory_space<vmem>>, vector<4x128xi32>
    tpu.vector_store %arg6[%c0_12, %c0_13], %31 {strides = array<i32>} : memref<4x128xi32, #tpu.memory_space<vmem>>, vector<4x128xi32>,
    %c0_14 = arith.constant 0 : index
    %c0_15 = arith.constant 0 : index
    %33 = vector.load %arg7[%c0_14, %c0_15] : memref<4x128xi32, #tpu.memory_space<vmem>>, vector<4x128xi32>
    tpu.vector_store %arg7[%c0_14, %c0_15], %25 {strides = array<i32>} : memref<4x128xi32, #tpu.memory_space<vmem>>, vector<4x128xi32>,
    %c0_16 = arith.constant 0 : index
    %c0_17 = arith.constant 0 : index
    %34 = vector.load %arg3[%c0_16, %c0_17] : memref<4x128xi32, #tpu.memory_space<vmem>>, vector<4x128xi32>
    %c0_i32_18 = arith.constant 0 : i32
    %35 = vector.broadcast %c0_i32_18 : i32 to vector<4x128xi32>
    %36 = arith.select %28, %35, %34 : vector<4x128xi1>, vector<4x128xi32>
    %c0_19 = arith.constant 0 : index
    %c0_20 = arith.constant 0 : index
    %37 = vector.load %arg8[%c0_19, %c0_20] : memref<4x128xi32, #tpu.memory_space<vmem>>, vector<4x128xi32>
    tpu.vector_store %arg8[%c0_19, %c0_20], %36 {strides = array<i32>} : memref<4x128xi32, #tpu.memory_space<vmem>>, vector<4x128xi32>,
    %c0_21 = arith.constant 0 : index
    %c0_22 = arith.constant 0 : index
    %38 = vector.load %arg9[%c0_21, %c0_22] : memref<4x128xi32, #tpu.memory_space<vmem>>, vector<4x128xi32>
    %39 = arith.extui %28 : vector<4x128xi1> to vector<4x128xi32>
    %cst_23 = arith.constant dense<0> : vector<4x128xi32>
    %40 = arith.cmpi ne, %38, %cst_23 : vector<4x128xi32>
    tpu.vector_store %arg9[%c0_21, %c0_22], %39 {strides = array<i32>} : memref<4x128xi32, #tpu.memory_space<vmem>>, vector<4x128xi32>,
    return
  }
  func.func @transform_0(%arg0: i32) -> (i32, i32) {
    %c0_i32 = arith.constant 0 : i32
    %c0_i32_0 = arith.constant 0 : i32
    return %arg0, %c0_i32 : i32, i32
  }
  func.func @transform_1(%arg0: i32) -> (i32, i32) {
    %c0_i32 = arith.constant 0 : i32
    %c0_i32_0 = arith.constant 0 : i32
    return %arg0, %c0_i32 : i32, i32
  }
  func.func @transform_2(%arg0: i32) -> (i32, i32) {
    %c0_i32 = arith.constant 0 : i32
    %c0_i32_0 = arith.constant 0 : i32
    return %arg0, %c0_i32 : i32, i32
  }
  func.func @transform_3(%arg0: i32) -> (i32, i32) {
    %c0_i32 = arith.constant 0 : i32
    %c0_i32_0 = arith.constant 0 : i32
    return %arg0, %c0_i32 : i32, i32
  }
  func.func @transform_4(%arg0: i32) -> (i32, i32) {
    %c0_i32 = arith.constant 0 : i32
    %c0_i32_0 = arith.constant 0 : i32
    return %arg0, %c0_i32 : i32, i32
  }
  func.func @transform_5(%arg0: i32) -> (i32, i32) {
    %c0_i32 = arith.constant 0 : i32
    %c0_i32_0 = arith.constant 0 : i32
    return %arg0, %c0_i32 : i32, i32
  }
  func.func @transform_6(%arg0: i32) -> (i32, i32) {
    %c0_i32 = arith.constant 0 : i32
    %c0_i32_0 = arith.constant 0 : i32
    return %arg0, %c0_i32 : i32, i32
  }
  func.func @transform_7(%arg0: i32) -> (i32, i32) {
    %c0_i32 = arith.constant 0 : i32
    %c0_i32_0 = arith.constant 0 : i32
    return %arg0, %c0_i32 : i32, i32
  }
  func.func @transform_8(%arg0: i32) -> (i32, i32) {
    %c0_i32 = arith.constant 0 : i32
    %c0_i32_0 = arith.constant 0 : i32
    return %arg0, %c0_i32 : i32, i32
  }
}

</mosaic_0001>

<llo_original>
// kernel: fire_increase_transition.1
$region0: #{fire_increase_transition.1}
  #allocation0 [shape = 'u32[]', space=smem, size = 0x4, offset = 0x4, fixed_abs, tag = 'smem constant byte address 0x4 - core index']
  #allocation1 [shape = 'u32[144,128]{1,0:T(1,128)}', space=vmem, size = 0x12000, scoped, tag = 'internal scratch']
  %s0 = inlined_call_operand.vmem [shape: s32[4,128], index: 0, kind: input, shape index: {}]
  %s1 = inlined_call_operand.vmem [shape: s32[4,128], index: 1, kind: input, shape index: {}]
  %s2 = inlined_call_operand.vmem [shape: s32[4,128], index: 2, kind: input, shape index: {}]
  %s3 = inlined_call_operand.vmem [shape: f32[4,128], index: 3, kind: input, shape index: {}]
  %s4 = inlined_call_operand.vmem [shape: f32[4,128], index: 4, kind: input, shape index: {}]
  %s5 = inlined_call_operand.vmem [shape: s32[4,128], index: 5, kind: output, shape index: {0}]
  %s6 = inlined_call_operand.vmem [shape: s32[4,128], index: 6, kind: output, shape index: {1}]
  %s7 = inlined_call_operand.vmem [shape: s32[4,128], index: 7, kind: output, shape index: {2}]
  %s8 = inlined_call_operand.vmem [shape: s32[4,128], index: 8, kind: output, shape index: {3}]
  %9 = xla_tuple %s5, %s6, %s7, %s8
  %s10 = sld [smem:[#allocation0]]
  $region54: #{fire_increase_transition.1} parent=0
    _
  %s12 = ssub.s32 1, %s10
  %s13 = scalar_select 0, %s12, %s10
  // Predicated region
  $region2: #{fire_increase_transition.1} parent=0 // pred_check
    _
  $region3: #{fire_increase_transition.1} parent=0 // pred_check_branch
    %15 = sbr.rel (0) target = $region5
  $region4: #{fire_increase_transition.1} parent=0 // pred_region
    _
  $region5: #{fire_increase_transition.1} parent=0 // pred_fallthru
    _
  // Predicated region
  $region6: #{fire_increase_transition.1} parent=0 // pred_check
    _
  $region7: #{fire_increase_transition.1} parent=0 // pred_check_branch
    %17 = sbr.rel (0) target = $region9
  $region8: #{fire_increase_transition.1} parent=0 // pred_region
    _
  $region9: #{fire_increase_transition.1} parent=0 // pred_fallthru
    _
  // Predicated region
  $region10: #{fire_increase_transition.1} parent=0 // pred_check
    _
  $region11: #{fire_increase_transition.1} parent=0 // pred_check_branch
    %19 = sbr.rel (0) target = $region13
  $region12: #{fire_increase_transition.1} parent=0 // pred_region
    _
  $region13: #{fire_increase_transition.1} parent=0 // pred_fallthru
    _
  // Predicated region
  $region14: #{fire_increase_transition.1} parent=0 // pred_check
    _
  $region15: #{fire_increase_transition.1} parent=0 // pred_check_branch
    %21 = sbr.rel (0) target = $region17
  $region16: #{fire_increase_transition.1} parent=0 // pred_region
    _
  $region17: #{fire_increase_transition.1} parent=0 // pred_fallthru
    _
  // Predicated region
  $region18: #{fire_increase_transition.1} parent=0 // pred_check
    _
  $region19: #{fire_increase_transition.1} parent=0 // pred_check_branch
    %23 = sbr.rel (0) target = $region21
  $region20: #{fire_increase_transition.1} parent=0 // pred_region
    _
  $region21: #{fire_increase_transition.1} parent=0 // pred_fallthru
    _
  %v24 = vld [vmem:[%s0] sm:$0xf]
  %v25 = vld [vmem:[%s1] sm:$0xf]
  %v26 = vld [vmem:[%s3] sm:$0xf]
  %v27 = vld [vmem:[%s4] sm:$0xf]
  %vm28 = vcmp.gt.s32.totalorder %v24, 0
  %vm29 = vcmp.gt.s32.totalorder %v25, 0
  %vm30 = vmand %vm28, %vm29
  %vm31 = vcmp.gt.s32.totalorder %v24, 0
  %v32 = vsel %vm31, %v24, 0
  %v33 = vcvt.s32.f32 %v32
  %vm34 = vcmp.gt.f32.partialorder %v33, %v26
  %vm35 = vmand %vm34, %vm30
  %vm36 = vcmp.eq.s32.totalorder %v25, 3
  %vm37 = vmand %vm35, %vm36
  %v38 = vsel %vm37, 0.3, 0.7
  %v39 = vsel %vm35, %v38, 0.0
  %vm40 = vcmp.lt.f32.partialorder %v27, %v39
  %v41 = vadd.s32 %v25, 1
  %v42 = vsel %vm40, %v41, %v25
  %vm43 = vcmp.ge.s32.totalorder %v42, 4
  %vm44 = vmand %vm40, %vm43
  %v45 = vsub.s32 0, %v24
  %v46 = vsel %vm44, %v45, %v24
  %47 = vst [vmem:[%s5] sm:$0xf] %v46
  %48 = vst [vmem:[%s6] sm:$0xf] %v42
  %v49 = vld [vmem:[%s2] sm:$0xf]
  %v50 = vsel %vm44, 0, %v49
  %51 = vst [vmem:[%s7] sm:$0xf] %v50
  %v52 = vsel %vm44, 1, 0
  %53 = vst [vmem:[%s8] sm:$0xf] %v52
  // Predicated region
  $region22: #{fire_increase_transition.1} parent=0 // pred_check
    _
  $region23: #{fire_increase_transition.1} parent=0 // pred_check_branch
    %55 = sbr.rel (0) target = $region25
  $region24: #{fire_increase_transition.1} parent=0 // pred_region
    _
  $region25: #{fire_increase_transition.1} parent=0 // pred_fallthru
    _
  // Predicated region
  $region26: #{fire_increase_transition.1} parent=0 // pred_check
    _
  $region27: #{fire_increase_transition.1} parent=0 // pred_check_branch
    %57 = sbr.rel (0) target = $region29
  $region28: #{fire_increase_transition.1} parent=0 // pred_region
    _
  $region29: #{fire_increase_transition.1} parent=0 // pred_fallthru
    _
  // Predicated region
  $region30: #{fire_increase_transition.1} parent=0 // pred_check
    _
  $region31: #{fire_increase_transition.1} parent=0 // pred_check_branch
    %59 = sbr.rel (0) target = $region33
  $region32: #{fire_increase_transition.1} parent=0 // pred_region
    _
  $region33: #{fire_increase_transition.1} parent=0 // pred_fallthru
    _
  // Predicated region
  $region34: #{fire_increase_transition.1} parent=0 // pred_check
    _
  $region35: #{fire_increase_transition.1} parent=0 // pred_check_branch
    %61 = sbr.rel (0) target = $region37
  $region36: #{fire_increase_transition.1} parent=0 // pred_region
    _
  $region37: #{fire_increase_transition.1} parent=0 // pred_fallthru
    _
  // Predicated region
  $region38: #{fire_increase_transition.1} parent=0 // pred_check
    _
  $region39: #{fire_increase_transition.1} parent=0 // pred_check_branch
    %63 = sbr.rel (0) target = $region41
  $region40: #{fire_increase_transition.1} parent=0 // pred_region
    _
  $region41: #{fire_increase_transition.1} parent=0 // pred_fallthru
    _
  // Predicated region
  $region42: #{fire_increase_transition.1} parent=0 // pred_check
    _
  $region43: #{fire_increase_transition.1} parent=0 // pred_check_branch
    %65 = sbr.rel (0) target = $region45
  $region44: #{fire_increase_transition.1} parent=0 // pred_region
    _
  $region45: #{fire_increase_transition.1} parent=0 // pred_fallthru
    _
  // Predicated region
  $region46: #{fire_increase_transition.1} parent=0 // pred_check
    _
  $region47: #{fire_increase_transition.1} parent=0 // pred_check_branch
    %67 = sbr.rel (0) target = $region49
  $region48: #{fire_increase_transition.1} parent=0 // pred_region
    _
  $region49: #{fire_increase_transition.1} parent=0 // pred_fallthru
    _
  // Predicated region
  $region50: #{fire_increase_transition.1} parent=0 // pred_check
    _
  $region51: #{fire_increase_transition.1} parent=0 // pred_check_branch
    %69 = sbr.rel (0) target = $region53
  $region52: #{fire_increase_transition.1} parent=0 // pred_region
    _
  $region53: #{fire_increase_transition.1} parent=0 // pred_fallthru
    _

</llo_original>
